<compile_context>
chip_gen: v6e
topology: v6e:2x2x1
jax: 0.10.0
libtpu: 0.0.40
codegen_flags: <defaults>
</compile_context>

<pallas_src>
import math
import functools

import jax
import jax.numpy as jnp
from jax.experimental import pallas as pl
from jax.experimental.pallas import tpu as pltpu


# ----------------------------- helpers --------------------------------------

def _round_up(a, m):
    return (a + m - 1) // m * m


def _hw_vmem_bytes():
    """Per-core VMEM capacity; conservative (v7x) fallback if query fails."""
    try:
        info = pltpu.get_tpu_info()
        v = getattr(info, "vmem_capacity_bytes", None)
        if v:
            return int(v)
    except Exception:
        pass
    return 64 << 20


# ----------------------------- Pallas kernel --------------------------------

def _conv1x1_relu_kernel(x_ref, w_ref, b_ref, o_ref):
    # x_ref: (TM, Cin_eff) bf16; w_ref: (Cin_eff, Cout_eff) bf16 (resident);
    # b_ref: (1, Cout_eff) f32 (resident); o_ref: (TM, Cout_eff) bf16.
    acc = jnp.dot(x_ref[...], w_ref[...], preferred_element_type=jnp.float32)
    acc = acc + b_ref[...]
    o_ref[...] = jnp.maximum(acc, 0.0).astype(o_ref.dtype)


def conv1x1_relu_rows(x_rows, w_eff, b_eff, *, out_dtype=jnp.bfloat16):
    """Matmul + bias + ReLU on pre-packed row matrices via Pallas."""
    m_rows, cin_eff = x_rows.shape
    cout_eff = w_eff.shape[1]
    in_b = jnp.dtype(x_rows.dtype).itemsize
    out_b = jnp.dtype(out_dtype).itemsize
    w_bytes = cin_eff * cout_eff * jnp.dtype(w_eff.dtype).itemsize
    b_bytes = cout_eff * 4

    hw_vmem = _hw_vmem_bytes()
    cap = min(hw_vmem * 3 // 4, 96 << 20)           # leave headroom vs physical
    per_row = cin_eff * in_b + cout_eff * out_b      # one buffered row (in+out)
    tm_cap = max(8, ((cap - w_bytes - b_bytes) // (2 * per_row)) // 8 * 8)
    tm_target = 8192 if hw_vmem >= (96 << 20) else 4096   # bigger tiles on 128MiB parts
    tm = min(tm_target, tm_cap)
    if m_rows > 8:
        # Keep >= 2 grid programs so the "parallel" axis shards over both
        # TensorCores on v7x (no-op on single-core v5e/v6e).
        tm = max(8, min(tm, _round_up(pl.cdiv(m_rows, 2), 8)))
    else:
        tm = m_rows                                   # full-extent block
    grid = (pl.cdiv(m_rows, tm),)

    vmem_limit = int(min(max(2 * tm * per_row + w_bytes + b_bytes + (2 << 20),
                             16 << 20), cap))

    cost = pl.CostEstimate(
        flops=2 * m_rows * cin_eff * cout_eff,
        transcendentals=0,
        bytes_accessed=m_rows * cin_eff * in_b + w_bytes + b_bytes
        + m_rows * cout_eff * out_b,
    )

    return pl.pallas_call(
        _conv1x1_relu_kernel,
        out_shape=jax.ShapeDtypeStruct((m_rows, cout_eff), out_dtype),
        grid=grid,
        in_specs=[
            pl.BlockSpec((tm, cin_eff), lambda i: (i, 0)),
            pl.BlockSpec((cin_eff, cout_eff), lambda i: (0, 0)),  # resident weight
            pl.BlockSpec((1, cout_eff), lambda i: (0, 0)),        # resident bias
        ],
        out_specs=pl.BlockSpec((tm, cout_eff), lambda i: (i, 0)),
        compiler_params=pltpu.CompilerParams(
            dimension_semantics=("parallel",),
            vmem_limit_bytes=vmem_limit,
        ),
        cost_estimate=cost,
    )(x_rows, w_eff, b_eff)


# ----------------------------- glue (plain JAX) ------------------------------

def pixel_shuffle_nhwc(x, r):
    """torch.nn.PixelShuffle(r) semantics on an NHWC tensor."""
    N, H, W, Crr = x.shape
    C = Crr // (r * r)
    x = x.reshape(N, H, W, C, r, r)
    x = jnp.transpose(x, (0, 1, 4, 2, 5, 3))      # (N, H, r, W, r, C)
    return x.reshape(N, H * r, W * r, C)


def pixel_shuffle_nchw(x, r):
    """torch.nn.PixelShuffle(r) on NCHW (reference path only)."""
    N, Crr, H, W = x.shape
    C = Crr // (r * r)
    x = x.reshape(N, C, r, r, H, W)
    x = jnp.transpose(x, (0, 1, 4, 2, 5, 3))
    return x.reshape(N, C, H * r, W * r)


def _init_conv_params(key, cin, cout):
    """Deterministic init matching PyTorch Conv2d default bounds (1x1 kernel)."""
    kw, kb = jax.random.split(key)
    bound = 1.0 / math.sqrt(cin)                   # fan_in for a 1x1 kernel
    w = jax.random.uniform(kw, (cout, cin, 1, 1), jnp.float32, -bound, bound)
    b = jax.random.uniform(kb, (cout,), jnp.float32, -bound, bound)
    return w, b


def make_upsample_params(key, n_channels, scale):
    """Raw parameters for one _UpsampleBlock (reduce=True): list of ((w, b), r)."""
    params = []
    if scale in (2, 4, 8):
        n_stages = int(round(math.log2(scale)))
        keys = jax.random.split(key, n_stages)
        for k in keys:
            params.append((_init_conv_params(k, n_channels, 4 * n_channels), 2))
    elif scale == 3:
        params.append((_init_conv_params(key, n_channels, 9 * n_channels), 3))
    else:
        raise ValueError(f"unsupported scale {scale}")
    return params


def pack_upsample_params(raw_params, compute_dtype=jnp.bfloat16):
    """Pre-transpose / pre-pack / pre-cast conv weights once, at init.

    For Cout not a multiple of 128, pack k pixels per matmul row using a
    block-diagonal weight so the kernel output's lane width is a multiple of
    128 (unmasked vst).  Falls back to lane padding if packing would make the
    resident weight too large.
    """
    stages = []
    for (w, b), r in raw_params:
        cout, cin = int(w.shape[0]), int(w.shape[1])
        if cout % 128 == 0:
            k = 1
        else:
            k = 128 // math.gcd(cout, 128)
            if (k * cin) * (k * cout) * jnp.dtype(compute_dtype).itemsize > (4 << 20):
                k = 1                                   # packing too large -> pad
        w2 = w.reshape(cout, cin).T.astype(jnp.float32)  # (Cin, Cout)
        if k == 1:
            cout_eff = _round_up(cout, 128) if cout >= 128 else cout
            w_eff = jnp.pad(w2, ((0, 0), (0, cout_eff - cout)))
            b_eff = jnp.pad(b.reshape(1, cout), ((0, 0), (0, cout_eff - cout)))
        else:
            w_eff = jnp.kron(jnp.eye(k, dtype=jnp.float32), w2)  # block-diagonal
            b_eff = jnp.tile(b.reshape(1, cout), (1, k))
        stages.append((w_eff.astype(compute_dtype),
                       b_eff.astype(jnp.float32),
                       dict(r=r, k=k, cin=cin, cout=cout)))
    return stages


def apply_upsample(stages, x_nchw, *, compute_dtype=jnp.bfloat16):
    """Whole upsample block; channels-last + bf16 internally, f32 NCHW out."""
    # Cast to bf16 *before* the entry layout copy so the transpose moves half
    # the bytes; under jit the cast+transpose fuse into one pass.
    x = jnp.transpose(x_nchw.astype(compute_dtype), (0, 2, 3, 1))   # NCHW -> NHWC
    n_stages = len(stages)
    for si, (w_eff, b_eff, meta) in enumerate(stages):
        r, k, cin, cout = meta["r"], meta["k"], meta["cin"], meta["cout"]
        N, H, W, _ = x.shape
        M = N * H * W
        m_pad = _round_up(M, k)
        x_mat = x.reshape(M, cin)
        if m_pad != M:
            x_mat = jnp.pad(x_mat, ((0, m_pad - M), (0, 0)))
        x_rows = x_mat.reshape(m_pad // k, k * cin)

        y_rows = conv1x1_relu_rows(x_rows, w_eff, b_eff, out_dtype=compute_dtype)

        cout_eff = w_eff.shape[1]
        if k == 1 and cout_eff != cout:
            y_mat = y_rows[:, :cout]                   # drop padded lanes
        else:
            y_mat = y_rows.reshape(m_pad, cout)
        if m_pad != M:
            y_mat = y_mat[:M]
        y = y_mat.reshape(N, H, W, cout)

        if si == n_stages - 1:
            # Fused: PixelShuffle + NHWC->NCHW exit transpose + f32 cast.
            C = cout // (r * r)
            y = y.reshape(N, H, W, C, r, r)
            y = jnp.transpose(y, (0, 3, 1, 4, 2, 5))   # (N, C, H, r, W, r)
            x = y.reshape(N, C, H * r, W * r).astype(x_nchw.dtype)
        else:
            # TODO(synk): fuse this intermediate PixelShuffle into the conv
            # kernel's output BlockSpec (row-block grid + in-kernel rearrange)
            # to remove the remaining full-tensor HBM round trip.
            x = pixel_shuffle_nhwc(y, r)
    return x


class UpsampleBlock:
    """JAX/Pallas equivalent of carn UpsampleBlock (reduce=True, act=ReLU)."""

    def __init__(self, n_channels, scale=None, multi_scale=True, reduce=True,
                 key=None, compute_dtype=jnp.bfloat16):
        if not reduce:
            # TODO(synk): reduce=False uses 3x3 same-padded convs (im2col);
            # only the default reduce=True (1x1 conv) path is implemented.
            raise NotImplementedError("reduce=False (3x3 conv) path not implemented")
        key = jax.random.PRNGKey(0) if key is None else key
        self.multi_scale = multi_scale
        self.compute_dtype = compute_dtype
        self._fns = {}
        if multi_scale:
            k2, k3, k4 = jax.random.split(key, 3)
            self.up2 = make_upsample_params(k2, n_channels, 2)
            self.up3 = make_upsample_params(k3, n_channels, 3)
            self.up4 = make_upsample_params(k4, n_channels, 4)
            for s, raw in ((2, self.up2), (3, self.up3), (4, self.up4)):
                packed = pack_upsample_params(raw, compute_dtype)
                self._fns[s] = jax.jit(functools.partial(
                    apply_upsample, packed, compute_dtype=compute_dtype))
        else:
            self.up = make_upsample_params(key, n_channels, scale)
            packed = pack_upsample_params(self.up, compute_dtype)
            self._fn = jax.jit(functools.partial(
                apply_upsample, packed, compute_dtype=compute_dtype))

    def __call__(self, x, scale=None):
        if self.multi_scale:
            if scale not in self._fns:
                raise ValueError(f"unsupported scale {scale}")
            return self._fns[scale](x)
        return self._fn(x)


# ------------------------------ reference check ------------------------------

def _ref_apply(raw_params, x, compute_dtype=jnp.bfloat16):
    """Pure-JAX NCHW reference matching the Pallas numerics path
    (bf16 activations/weights, f32 accumulate + bias + ReLU, bf16 stores)."""
    h = x.astype(compute_dtype)
    for (w, b), r in raw_params:
        w2 = w.reshape(w.shape[0], w.shape[1])
        y = jnp.einsum("nchw,oc->nohw", h, w2.astype(compute_dtype),
                       preferred_element_type=jnp.float32)
        y = jnp.maximum(y + b.reshape(1, -1, 1, 1), 0.0).astype(compute_dtype)
        h = pixel_shuffle_nchw(y, r)
    return h.astype(x.dtype)


if __name__ == "__main__":
    key = jax.random.PRNGKey(0)
    kx, kp = jax.random.split(key)

    N, C, H, W = 2, 4, 16, 16
    x = jax.random.normal(kx, (N, C, H, W), dtype=jnp.float32)

    block = UpsampleBlock(n_channels=C, multi_scale=True, reduce=True, key=kp)

    ok = True
    for scale, raw in ((2, block.up2), (3, block.up3), (4, block.up4)):
        out = block(x, scale)
        out = jax.block_until_ready(out)
        assert out.shape == (N, C, H * scale, W * scale), out.shape
        ref = _ref_apply(raw, x)
        # bf16 matmul inputs / activations -> loosened tolerance.
        ok = ok and bool(jnp.allclose(out, ref, atol=2e-2, rtol=2e-2))

    if ok:
        print("KERNEL_OK")
</pallas_src>

<mosaic_0001>
module attributes {stable_mosaic.version = 11 : i64} {
  func.func @_conv1x1_relu_kernel(%arg0: i32, %arg1: memref<32x32xbf16, #tpu.memory_space<vmem>>, %arg2: memref<32x128xbf16, #tpu.memory_space<vmem>>, %arg3: memref<1x128xf32, #tpu.memory_space<vmem>>, %arg4: memref<32x128xbf16, #tpu.memory_space<vmem>>) attributes {dimension_semantics = [#tpu.dimension_semantics<parallel>], iteration_bounds = array<i64: 2>, scalar_prefetch = 0 : i64, scratch_operands = 0 : i64, tpu.core_type = #tpu.core_type<tc>, window_params = [{transform_indices = @transform_0, window_bounds = array<i64: 32, 32>}, {pipeline_mode = #tpu.pipeline_mode<synchronous>, transform_indices = @transform_1, window_bounds = array<i64: 32, 128>}, {pipeline_mode = #tpu.pipeline_mode<synchronous>, transform_indices = @transform_2, window_bounds = array<i64: 1, 128>}, {transform_indices = @transform_3, window_bounds = array<i64: 32, 128>}]} {
    %c0 = arith.constant 0 : index
    %c0_0 = arith.constant 0 : index
    %0 = vector.load %arg1[%c0, %c0_0] : memref<32x32xbf16, #tpu.memory_space<vmem>>, vector<32x32xbf16>
    %c0_1 = arith.constant 0 : index
    %c0_2 = arith.constant 0 : index
    %1 = vector.load %arg2[%c0_1, %c0_2] : memref<32x128xbf16, #tpu.memory_space<vmem>>, vector<32x128xbf16>
    %cst = arith.constant dense<0.000000e+00> : vector<32x128xf32>
    %2 = tpu.matmul %0, %1, %cst {dimension_numbers = #tpu.dot_dimension_numbers<[1], [0], [0], [1], [0, 0, 1, 1], [], []>} : vector<32x32xbf16>, vector<32x128xbf16>, vector<32x128xf32> -> vector<32x128xf32>
    %c0_3 = arith.constant 0 : index
    %c0_4 = arith.constant 0 : index
    %3 = vector.load %arg3[%c0_3, %c0_4] : memref<1x128xf32, #tpu.memory_space<vmem>>, vector<1x128xf32>
    %4 = vector.broadcast %3 : vector<1x128xf32> to vector<32x128xf32>
    %5 = arith.addf %2, %4 : vector<32x128xf32>
    %cst_5 = arith.constant 0.000000e+00 : f32
    %6 = vector.broadcast %cst_5 : f32 to vector<32x128xf32>
    %7 = arith.maximumf %5, %6 : vector<32x128xf32>
    %8 = arith.truncf %7 : vector<32x128xf32> to vector<32x128xbf16>
    %c0_6 = arith.constant 0 : index
    %c0_7 = arith.constant 0 : index
    %9 = vector.load %arg4[%c0_6, %c0_7] : memref<32x128xbf16, #tpu.memory_space<vmem>>, vector<32x128xbf16>
    tpu.vector_store %arg4[%c0_6, %c0_7], %8 {strides = array<i32>} : memref<32x128xbf16, #tpu.memory_space<vmem>>, vector<32x128xbf16>,
    return
  }
  func.func @transform_0(%arg0: i32) -> (i32, i32) {
    %c0_i32 = arith.constant 0 : i32
    %c0_i32_0 = arith.constant 0 : i32
    return %arg0, %c0_i32 : i32, i32
  }
  func.func @transform_1(%arg0: i32) -> (i32, i32) {
    %c0_i32 = arith.constant 0 : i32
    %c0_i32_0 = arith.constant 0 : i32
    %c0_i32_1 = arith.constant 0 : i32
    return %c0_i32, %c0_i32_0 : i32, i32
  }
  func.func @transform_2(%arg0: i32) -> (i32, i32) {
    %c0_i32 = arith.constant 0 : i32
    %c0_i32_0 = arith.constant 0 : i32
    %c0_i32_1 = arith.constant 0 : i32
    return %c0_i32, %c0_i32_0 : i32, i32
  }
  func.func @transform_3(%arg0: i32) -> (i32, i32) {
    %c0_i32 = arith.constant 0 : i32
    %c0_i32_0 = arith.constant 0 : i32
    return %arg0, %c0_i32 : i32, i32
  }
}

</mosaic_0001>

<llo_original>
// kernel: apply_upsample.1
$region0: #{apply_upsample.1}
  #allocation0 [shape = 'u32[]', space=smem, size = 0x4, offset = 0x4, fixed_abs, tag = 'smem constant byte address 0x4 - core index']
  #allocation1 [shape = 'u32[144,128]{1,0:T(1,128)}', space=vmem, size = 0x12000, scoped, tag = 'internal scratch']
  %s0 = inlined_call_operand.vmem [shape: bf16[64,32], index: 0, kind: input, shape index: {}]
  %s1 = inlined_call_operand.hbm [shape: bf16[32,128], index: 1, kind: input, shape index: {}]
  %s2 = inlined_call_operand.hbm [shape: f32[1,128], index: 2, kind: input, shape index: {}]
  %s3 = inlined_call_operand.vmem [shape: bf16[64,128], index: 3, kind: output, shape index: {}]
  %s4 = sld [smem:[#allocation0]]
  $region53: #{apply_upsample.1} parent=0
    _
  %s6 = ssub.s32 1, %s4
  %s7 = scalar_select 0, %s6, %s4
  $region1: #{apply_upsample.1} parent=0
    #allocation2 [shape = 'u8[8192]{0}', space=vmem, size = 0x2000, scoped, tag = 'input window, operand 1, single buffered']
    #allocation3 [shape = 's32[2]{0}', space=sflag, size = 0x8, scoped, tag = 'scoped memory for apply_upsample.1']
    #allocation4 [shape = 'u8[512]{0}', space=vmem, size = 0x400, scoped, tag = 'input window, operand 2, single buffered']
    #allocation5 [shape = 's32[1]{0}', space=sflag, size = 0x4, scoped, tag = 'scoped memory for apply_upsample.1']
    %8 = vsyncpa [#allocation3], 0
    %9 = vsyncpa [#allocation5], 0
    loop: start=0, step=1, limit=4
    $region2: #{apply_upsample.1} parent=1 // loop_pre_header
      _
    $region3: #{apply_upsample.1} parent=1 // loop_header
      %s11 = sphi 0, %s15
      %p12 = scmp.ge.s32.totalorder %s11, 4
      %s21 = sphi 0, %s23
      %s24 = sphi 0, %s21
      %s25 = sphi 0, %s24
      %s41 = sphi 0, %s25
      %s45 = sphi 0, %s45
      %s47 = sphi 0, %s45
      %s48 = sphi 0, %s47
      %s62 = sphi 0, %s48
      %s66 = sphi 0, %s66
      %s68 = sphi 0, %s66
      %s69 = sphi 0, %s68
      %s83 = sphi 0, %s69
      %s89 = sphi 0, %s91
      %s92 = sphi 0, %s89
      %s93 = sphi 0, %s92
      %s109 = sphi 0, %s93
    $region4: #{apply_upsample.1} parent=1 // loop_header_branch
      %14 = sbr.rel (%p12) target = $region8
    $region5: #{apply_upsample.1} parent=1 // loop_body
      %s16 = ssub.s32 %s11, 1
      %s17 = ssub.s32 %s11, 2
      %s18 = sadd.s32 %s11, 1
      %s19 = ssub.s32 %s11, %s18
      %p20 = scmp.eq.s32.totalorder %s19, 0
      %s22 = sadd.s32 %s21, 1
      %s23 = scalar_select %p20, %s21, %s22
      %p26 = pneg %p20
      %p27 = scmp.eq.s32.totalorder %s11, 1
      %p28 = por %p26, %p27
      %p29 = scmp.ne.s32.totalorder %s21, %s24
      %p30 = scmp.eq.s32.totalorder %s11, 0
      %p31 = por %p29, %p30
      %p32 = scmp.ne.s32.totalorder %s21, %s24
      %p33 = scmp.eq.s32.totalorder %s16, 1
      %p34 = por %p32, %p33
      %p35 = scmp.ne.s32.totalorder %s24, %s25
      %p36 = scmp.eq.s32.totalorder %s16, 0
      %p37 = por %p35, %p36
      %p38 = scmp.ne.s32.totalorder %s24, %s25
      %p39 = scmp.eq.s32.totalorder %s17, 1
      %p40 = por %p38, %p39
      %p42 = scmp.ne.s32.totalorder %s25, %s41
      %p43 = scmp.eq.s32.totalorder %s17, 0
      %p44 = por %p42, %p43
      %s46 = sadd.s32 %s45, 1
      %p49 = scmp.eq.s32.totalorder %s11, 1
      %p50 = scmp.ne.s32.totalorder %s45, %s47
      %p51 = scmp.eq.s32.totalorder %s11, 0
      %p52 = por %p50, %p51
      %p53 = scmp.ne.s32.totalorder %s45, %s47
      %p54 = scmp.eq.s32.totalorder %s16, 1
      %p55 = por %p53, %p54
      %p56 = scmp.ne.s32.totalorder %s47, %s48
      %p57 = scmp.eq.s32.totalorder %s16, 0
      %p58 = por %p56, %p57
      %p59 = scmp.ne.s32.totalorder %s47, %s48
      %p60 = scmp.eq.s32.totalorder %s17, 1
      %p61 = por %p59, %p60
      %p63 = scmp.ne.s32.totalorder %s48, %s62
      %p64 = scmp.eq.s32.totalorder %s17, 0
      %p65 = por %p63, %p64
      %s67 = sadd.s32 %s66, 1
      %p70 = scmp.eq.s32.totalorder %s11, 1
      %p71 = scmp.ne.s32.totalorder %s66, %s68
      %p72 = scmp.eq.s32.totalorder %s11, 0
      %p73 = por %p71, %p72
      %p74 = scmp.ne.s32.totalorder %s66, %s68
      %p75 = scmp.eq.s32.totalorder %s16, 1
      %p76 = por %p74, %p75
      %p77 = scmp.ne.s32.totalorder %s68, %s69
      %p78 = scmp.eq.s32.totalorder %s16, 0
      %p79 = por %p77, %p78
      %p80 = scmp.ne.s32.totalorder %s68, %s69
      %p81 = scmp.eq.s32.totalorder %s17, 1
      %p82 = por %p80, %p81
      %p84 = scmp.ne.s32.totalorder %s69, %s83
      %p85 = scmp.eq.s32.totalorder %s17, 0
      %p86 = por %p84, %p85
      %s87 = ssub.s32 %s11, %s18
      %p88 = scmp.eq.s32.totalorder %s87, 0
      %s90 = sadd.s32 %s89, 1
      %s91 = scalar_select %p88, %s89, %s90
      %p94 = pneg %p88
      %p95 = scmp.eq.s32.totalorder %s11, 1
      %p96 = por %p94, %p95
      %p97 = scmp.ne.s32.totalorder %s89, %s92
      %p98 = scmp.eq.s32.totalorder %s11, 0
      %p99 = por %p97, %p98
      %p100 = scmp.ne.s32.totalorder %s89, %s92
      %p101 = scmp.eq.s32.totalorder %s16, 1
      %p102 = por %p100, %p101
      %p103 = scmp.ne.s32.totalorder %s92, %s93
      %p104 = scmp.eq.s32.totalorder %s16, 0
      %p105 = por %p103, %p104
      %p106 = scmp.ne.s32.totalorder %s92, %s93
      %p107 = scmp.eq.s32.totalorder %s17, 1
      %p108 = por %p106, %p107
      %p110 = scmp.ne.s32.totalorder %s93, %s109
      %p111 = scmp.eq.s32.totalorder %s17, 0
      %p112 = por %p110, %p111
      %p113 = scmp.le.s32.totalorder 1, %s11
      %p114 = scmp.lt.s32.totalorder %s11, 3
      %p115 = pnand %p113, %p114
      %p116 = pneg %p115
      // Predicated region
      $region9: #{apply_upsample.1} parent=5 // pred_check
        _
      $region10: #{apply_upsample.1} parent=5 // pred_check_branch
        %118 = sbr.rel (%p115) target = $region12
      $region11: #{apply_upsample.1} parent=5 // pred_region
        %s119 = ssub.s32 %s11, 1
        // Predicated region
        $region13: #{apply_upsample.1} parent=11 // pred_check
          %p120 = pneg %p58
        $region14: #{apply_upsample.1} parent=11 // pred_check_branch
          %122 = sbr.rel (%p120) target = $region16
        $region15: #{apply_upsample.1} parent=11 // pred_region
          %s124 = ssub.s32 256, 256
          %125 = vsyncadd [#allocation3], %s124
          %s126 = sshll.u32 [#allocation2], 4
          %s127 = int_to_ptr.vmem [resolvable:$true] %s126
          %132 = dma.hbm_to_vmem [thread:$0]  %s1, 256, %s127, [#allocation3], 64, 64, 4
        $region16: #{apply_upsample.1} parent=11 // pred_fallthru
          _
        // Predicated region
        $region17: #{apply_upsample.1} parent=11 // pred_check
          %p133 = pneg %p79
        $region18: #{apply_upsample.1} parent=11 // pred_check_branch
          %135 = sbr.rel (%p133) target = $region20
        $region19: #{apply_upsample.1} parent=11 // pred_region
          %s137 = ssub.s32 16, 16
          %138 = vsyncadd [#allocation5], %s137
          %s140 = sshll.u32 [#allocation4], 4
          %s141 = int_to_ptr.vmem [resolvable:$true] %s140
          %143 = dma.hbm_to_vmem [thread:$0]  %s2, 16, %s141, [#allocation5]
        $region20: #{apply_upsample.1} parent=11 // pred_fallthru
          _
      $region12: #{apply_upsample.1} parent=5 // pred_fallthru
        _
      %p144 = scmp.lt.s32.totalorder %s11, 2
      // Predicated region
      $region21: #{apply_upsample.1} parent=5 // pred_check
        %p145 = pneg %p144
      $region22: #{apply_upsample.1} parent=5 // pred_check_branch
        %147 = sbr.rel (%p145) target = $region24
      $region23: #{apply_upsample.1} parent=5 // pred_region
        // Predicated region
        $region25: #{apply_upsample.1} parent=23 // pred_check
          %p148 = pneg %p31
        $region26: #{apply_upsample.1} parent=23 // pred_check_branch
          %150 = sbr.rel (%p148) target = $region28
        $region27: #{apply_upsample.1} parent=23 // pred_region
          %s151 = smul.u32 4, %s11
          %p152 = scmp.lt.s32.totalorder %s151, 7
          %s153 = scalar_select %p152, %s151, 7
          %s154 = smul.addr %s153, 4
          %s155 = scalar_lea.vmem %s0, %s154
          %s156 = smul.u32 4, %s11
        $region28: #{apply_upsample.1} parent=23 // pred_fallthru
          _
      $region24: #{apply_upsample.1} parent=5 // pred_fallthru
        _
      %p157 = scmp.le.s32.totalorder 1, %s11
      %p158 = scmp.lt.s32.totalorder %s11, 3
      %p159 = pnand %p157, %p158
      %p160 = pneg %p159
      // Predicated region
      $region29: #{apply_upsample.1} parent=5 // pred_check
        _
      $region30: #{apply_upsample.1} parent=5 // pred_check_branch
        %162 = sbr.rel (%p159) target = $region32
      $region31: #{apply_upsample.1} parent=5 // pred_region
        %s163 = ssub.s32 %s11, 1
        // Predicated region
        $region33: #{apply_upsample.1} parent=31 // pred_check
          %p164 = pneg %p58
        $region34: #{apply_upsample.1} parent=31 // pred_check_branch
          %166 = sbr.rel (%p164) target = $region36
        $region35: #{apply_upsample.1} parent=31 // pred_region
          %167 = dma.done [#allocation3], 256
        $region36: #{apply_upsample.1} parent=31 // pred_fallthru
          _
        // Predicated region
        $region37: #{apply_upsample.1} parent=31 // pred_check
          %p168 = pneg %p79
        $region38: #{apply_upsample.1} parent=31 // pred_check_branch
          %170 = sbr.rel (%p168) target = $region40
        $region39: #{apply_upsample.1} parent=31 // pred_region
          %171 = dma.done [#allocation5], 16
        $region40: #{apply_upsample.1} parent=31 // pred_fallthru
          _
        %s172 = smul.u32 4, %s16
        %p173 = scmp.lt.s32.totalorder %s172, 7
        %s174 = scalar_select %p173, %s172, 7
        %s175 = smul.addr %s174, 4
        %s176 = scalar_lea.vmem %s0, %s175
        %p177 = pneg %p37
        %p178 = pneg %p34
        %p179 = pneg %p58
        %p180 = pneg %p55
        %p181 = pneg %p79
        %p182 = pneg %p76
        %p183 = pneg %p105
        %p184 = pneg %p102
        %s185 = smul.u32 4, %s16
        %p186 = scmp.lt.s32.totalorder %s185, 7
        %s187 = scalar_select %p186, %s185, 7
        %s188 = smul.addr %s187, 4
        %s189 = scalar_lea.vmem %s3, %s188
        %s190 = smul.u32 4, %s16
        %p191 = scmp.lt.s32.totalorder %s190, 7
        %s192 = scalar_select %p191, %s190, 7
        %s193 = smul.addr %s192, 4
        %s194 = scalar_lea.vmem %s0, %s193
        %s195 = smul.u32 4, %s16
        %s196 = smul.u32 4, %s16
        %p197 = scmp.lt.s32.totalorder %s196, 7
        %s198 = scalar_select %p197, %s196, 7
        %s199 = smul.addr %s198, 4
        %s200 = scalar_lea.vmem %s3, %s199
        %s201 = smul.u32 4, %s16
        %v203 = vld [vmem:[%s194] sm:$0xf]
        %v204 = vld [vmem:[%s194 + $0x4] sm:$0xf]
        %v205 = vld [vmem:[%s194 + $0x8] sm:$0xf]
        %v206 = vld [vmem:[%s194 + $0xc] sm:$0xf]
        %v207 = vld [vmem:[#allocation2] sm:$0xf]
        %v208 = vld [vmem:[#allocation2 + $0x4] sm:$0xf]
        %v209 = vld [vmem:[#allocation2 + $0x8] sm:$0xf]
        %v210 = vld [vmem:[#allocation2 + $0xc] sm:$0xf]
        %v211 = vld [vmem:[#allocation4] sm:$0x1]
        %v213 = vlaneseq
        %v214 = vshrl.u32 %v213, 7
        %v215 = vsub.s32 0, %v214
        %v216 = vrot.slane %v211, %v215
        %v222 = vunpack.c.l.b16 %v203
        %v223 = vunpack.c.l.b16 %v204
        %v224 = vunpack.c.l.b16 %v205
        %v225 = vunpack.c.l.b16 %v206
        %v226 = vpack.c.b16 %v223, %v222
        %v227 = vpack.c.b16 %v225, %v224
        %v232 = vunpack.c.l.b16 %v207
        %v233 = vunpack.c.l.b16 %v208
        %v234 = vunpack.c.l.b16 %v209
        %v235 = vunpack.c.l.b16 %v210
        %v236 = vpack.c.b16 %v233, %v232
        %v237 = vpack.c.b16 %v235, %v234
        %vm240 = vcmask 261120
        %v242 = vsel %vm240, %v226, 0
        %v245 = vsel %vm240, %v227, 0
        %247 = vmatprep.subr.bf16.mxu0 0
        %248 = vmatpush1.bf16.msra.mxu0 0
        %249 = vmatprep.subr.bf16.mxu0 0
        %250 = vmatpush1.bf16.msra.mxu0 0
        %251 = vmatprep.subr.bf16.mxu0 0
        %252 = vmatpush1.bf16.msra.mxu0 0
        %253 = vmatprep.subr.bf16.mxu0 0
        %254 = vmatpush1.bf16.msra.mxu0 0
        %255 = vmatprep.subr.bf16.mxu0 0
        %256 = vmatpush1.bf16.msra.mxu0 0
        %257 = vmatprep.subr.bf16.mxu0 0
        %258 = vmatpush1.bf16.msra.mxu0 0
        %259 = vmatprep.subr.bf16.mxu0 0
        %260 = vmatpush1.bf16.msra.mxu0 %v237
        %261 = vmatprep.subr.bf16.mxu0 0
        %262 = vmatpush1.bf16.msra.mxu0 %v236
        %263 = vmatprep.subr.bf16.mxu0 0
        %264 = vmatpush2.bf16.msra.mxu0 0
        %265 = vmatprep.subr.bf16.mxu0 0
        %266 = vmatpush2.bf16.msra.mxu0 0
        %267 = vmatprep.subr.bf16.mxu0 0
        %268 = vmatpush2.bf16.msra.mxu0 0
        %269 = vmatprep.subr.bf16.mxu0 0
        %270 = vmatpush2.bf16.msra.mxu0 0
        %271 = vmatprep.subr.bf16.mxu0 0
        %272 = vmatpush2.bf16.msra.mxu0 0
        %273 = vmatprep.subr.bf16.mxu0 0
        %274 = vmatpush2.bf16.msra.mxu0 0
        %275 = vmatprep.subr.bf16.mxu0 0
        %276 = vmatpush2.bf16.msra.mxu0 0
        %277 = vmatprep.subr.bf16.mxu0 0
        %278 = vmatpush2.bf16.msra.mxu0 0
        %279 = vmatprep.mubr.bf16.mxu0 0
        %280 = vmatmul.mubr.bf16.gmra.mxu0 %v242
        %v281 = vpop.f32.mrf.mxu0
        %v282 = vadd.f32 %v216, %v281
        %v283 = vpop.f32.mrf.mxu0
        %v284 = vpop.f32.mrf.mxu0
        %v285 = vadd.f32 %v216, %v284
        %v286 = vpop.f32.mrf.mxu0
        %287 = vmatprep.mubr.bf16.mxu0 0
        %288 = vmatmul.mubr.bf16.gmra.mxu0 %v245
        %v289 = vpop.f32.mrf.mxu0
        %v290 = vadd.f32 %v216, %v289
        %v291 = vpop.f32.mrf.mxu0
        %v292 = vpop.f32.mrf.mxu0
        %v293 = vadd.f32 %v216, %v292
        %v294 = vpop.f32.mrf.mxu0
        %295 = vdwg.mxu0
        %v296 = vmax.f32 %v282, 0.0
        %v297 = vmax.f32 %v285, 0.0
        %v298 = vmax.f32 %v290, 0.0
        %v299 = vmax.f32 %v293, 0.0
        %v300 = vpack.c.bf16 %v297, %v296
        %v301 = vpack.c.bf16 %v299, %v298
        %v304 = vunpack.c.l.b16 %v300
        %v305 = vunpack.c.h.b16 %v300
        %v306 = vunpack.c.l.b16 %v301
        %v307 = vunpack.c.h.b16 %v301
        %v308 = vpack.c.b16 %v304, %v304
        %v309 = vpack.c.b16 %v305, %v305
        %v310 = vpack.c.b16 %v306, %v306
        %v311 = vpack.c.b16 %v307, %v307
        %316 = vst [vmem:[%s200] sm:$0xf] %v308
        %317 = vst [vmem:[%s200 + $0x4] sm:$0xf] %v309
        %318 = vst [vmem:[%s200 + $0x8] sm:$0xf] %v310
        %319 = vst [vmem:[%s200 + $0xc] sm:$0xf] %v311
        %s320 = smul.u32 4, %s16
        %p321 = scmp.lt.s32.totalorder %s320, 7
        %s322 = scalar_select %p321, %s320, 7
        %s323 = smul.addr %s322, 4
        %s324 = scalar_lea.vmem %s3, %s323
        // Predicated region
        $region41: #{apply_upsample.1} parent=31 // pred_check
          %p325 = pneg %p102
        $region42: #{apply_upsample.1} parent=31 // pred_check_branch
          %327 = sbr.rel (%p325) target = $region44
        $region43: #{apply_upsample.1} parent=31 // pred_region
          %s328 = smul.u32 4, %s16
        $region44: #{apply_upsample.1} parent=31 // pred_fallthru
          _
      $region32: #{apply_upsample.1} parent=5 // pred_fallthru
        _
      %p329 = scmp.le.s32.totalorder 2, %s11
      // Predicated region
      $region45: #{apply_upsample.1} parent=5 // pred_check
        %p330 = pneg %p329
      $region46: #{apply_upsample.1} parent=5 // pred_check_branch
        %332 = sbr.rel (%p330) target = $region48
      $region47: #{apply_upsample.1} parent=5 // pred_region
        %s333 = ssub.s32 %s11, 2
        // Predicated region
        $region49: #{apply_upsample.1} parent=47 // pred_check
          %p334 = pneg %p108
        $region50: #{apply_upsample.1} parent=47 // pred_check_branch
          %336 = sbr.rel (%p334) target = $region52
        $region51: #{apply_upsample.1} parent=47 // pred_region
          %s337 = smul.u32 4, %s17
          %p338 = scmp.lt.s32.totalorder %s337, 7
          %s339 = scalar_select %p338, %s337, 7
          %s340 = smul.addr %s339, 4
          %s341 = scalar_lea.vmem %s3, %s340
        $region52: #{apply_upsample.1} parent=47 // pred_fallthru
          _
      $region48: #{apply_upsample.1} parent=5 // pred_fallthru
        _
    $region6: #{apply_upsample.1} parent=1 // loop_footer
      %s15 = sadd.s32 1, %s11
    $region7: #{apply_upsample.1} parent=1 // loop_footer_branch
      %10 = sbr.rel target = $region3
    $region8: #{apply_upsample.1} parent=1 // loop_exit
      _
    %342 = vsyncpa [#allocation3], 1
    %s343 = scalar_lea.sflag [#allocation3], 1
    %344 = vsyncpa %s343, 1
    %345 = vsyncpa [#allocation5], 1

</llo_original>
